<compile_context>
chip_gen: v6e
topology: v6e:2x2x1
jax: 0.10.0
libtpu: 0.0.40
codegen_flags: <defaults>
</compile_context>

<pallas_src>
import functools

import jax
import jax.numpy as jnp
import numpy as np
from jax.experimental import pallas as pl
from jax.experimental.pallas import tpu as pltpu


def _sigmoid(z):
    # sigmoid(z) == 0.5 * (1 + tanh(z / 2)) : one EUP push instead of exp+add+recip.
    return 0.5 * (1.0 + jnp.tanh(0.5 * z))


def _lff_kernel(scal_ref, x_ref, wf_ref, masks_ref, tpb1_ref, tpw2_ref, cw_ref,
                out_ref, *, Cr, off_tp, shifts, B):
    b = pl.program_id(0)
    x = x_ref[...]                                            # (C, HW) f32

    # One fused MXU matmul:
    #   rows 0..7        : the 8 shifted 3x3 spatial-attention taps
    #   row  8           : centre tap
    #   rows off_tp..+Cr : threshold-predictor squeeze conv (tp_w1)
    M = jnp.dot(wf_ref[...], x, preferred_element_type=jnp.float32)

    # ---- spatial attention: 3x3 SAME conv (C -> 1) + sigmoid, via roll + mask.
    # Source-side boundary masks applied with ONE full-sublane (8, HW) multiply;
    # the 8 lane-rolls go to the XLU (slack unit), leaving only 8 row-adds on the VPU.
    sa_taps = M[0:8, :] * masks_ref[...]                      # (8, HW)
    acc = M[8:9, :] + scal_ref[B]                             # centre tap + sa_b
    for j, s in enumerate(shifts):                            # static shifts, unrolled
        acc = acc + pltpu.roll(sa_taps[j:j + 1, :], shift=s, axis=1)
    sw = _sigmoid(acc)                                        # (1, HW)

    # ---- adaptive threshold predictor: both 1x1 convs on the MXU.
    t1 = jnp.maximum(M[off_tp:off_tp + Cr, :] + tpb1_ref[...], 0.0)       # (Cr, HW)
    rel = _sigmoid(jnp.dot(tpw2_ref[...], t1,
                           preferred_element_type=jnp.float32) + scal_ref[B + 1])

    # ---- soft-threshold mask + output: one full-width lane-dense store.
    absx = jnp.abs(x)
    thr = scal_ref[b] * rel                                   # (1, HW) = gthr_b * rel
    mask = _sigmoid((absx - thr) * 10.0)
    out_ref[...] = (x * mask * cw_ref[...] * sw).astype(out_ref.dtype)


def learnable_feature_filter_adaptive(x, params):
    """Forward pass of LearnableFeatureFilter(mode='adaptive'); x: (B, C, H, W) f32."""
    B, C, H, W = x.shape
    HW = H * W
    Cr = params["ca_w1"].shape[0]
    # The roll+mask spatial conv is only valid for a 3x3, stride-1, SAME conv.
    assert params["sa_w"].shape == (1, C, 3, 3), "spatial attention must be 3x3 SAME"

    x32 = x.astype(jnp.float32)
    xr = x32.reshape(B, C, HW)                                # native layout, no transpose

    # ---- wrapper glue (small reductions over x; shares the HBM pass of the quantile)
    abs_flat = jnp.abs(x32).reshape(B, -1)
    # TODO(synk): the exact sort-based quantile dominates end-to-end at scale; replace
    # with a two-pass histogram/bucketed quantile fused into this read of x.
    gthr = jnp.quantile(abs_flat, 0.85, axis=1)                                   # (B,)

    # Channel attention only needs the per-image channel means -> compute here (tiny).
    pooled = jnp.mean(x32, axis=(2, 3))                                           # (B, C)
    h1 = jax.nn.relu(pooled @ params["ca_w1"].T + params["ca_b1"])
    cw = jax.nn.sigmoid(h1 @ params["ca_w2"].T + params["ca_b2"])                 # (B, C)
    cw = cw.reshape(B, C, 1).astype(jnp.float32)

    # ---- parameter packing ----
    taps = [(a, b) for a in (-1, 0, 1) for b in (-1, 0, 1) if (a, b) != (0, 0)]
    sa_w = params["sa_w"][0]                                                      # (C, 3, 3)
    sa_rows = [sa_w[:, a + 1, b + 1] for (a, b) in taps] + [sa_w[:, 1, 1]]
    sa_w9 = jnp.stack(sa_rows, axis=0).astype(jnp.float32)                        # (9, C)
    off_tp = 16                                                                   # 8-aligned
    R = off_tp + Cr
    wfused = jnp.zeros((R, C), jnp.float32)
    wfused = wfused.at[0:9].set(sa_w9)
    wfused = wfused.at[off_tp:off_tp + Cr].set(params["tp_w1"].astype(jnp.float32))

    # Source-side SAME-padding validity masks: roll(mask_src * M, s) == mask_dst * roll(M, s)
    shifts = tuple(int((-(a * W + b)) % HW) for (a, b) in taps)
    hh, ww = np.meshgrid(np.arange(H), np.arange(W), indexing="ij")
    m = np.empty((8, HW), np.float32)
    for j, (a, b) in enumerate(taps):
        dest = (((hh + a >= 0) & (hh + a < H) & (ww + b >= 0) & (ww + b < W))
                .reshape(-1).astype(np.float32))
        m[j] = np.roll(dest, -shifts[j])
    masks = jnp.asarray(m)                                                        # (8, HW)

    # SMEM scalar pack: [gthr(B), sa_b, tp_b2]
    scalars = jnp.concatenate(
        [gthr, params["sa_b"].reshape(1), params["tp_b2"].reshape(1)]).astype(jnp.float32)
    tpb1 = params["tp_b1"].reshape(Cr, 1).astype(jnp.float32)
    tpw2 = params["tp_w2"].reshape(1, Cr).astype(jnp.float32)

    kernel = functools.partial(_lff_kernel, Cr=Cr, off_tp=off_tp, shifts=shifts, B=B)

    block_bytes = C * HW * 4
    vmem_limit = int(min(96 << 20, max(32 << 20, 12 * block_bytes + (2 << 20))))
    cost = pl.CostEstimate(
        flops=int(B * (2 * R * C * HW + 2 * Cr * HW + 20 * C * HW)),
        transcendentals=int(B * HW * (C + 2)),
        bytes_accessed=int(2 * B * C * HW * 4))

    out = pl.pallas_call(
        kernel,
        out_shape=jax.ShapeDtypeStruct((B, C, HW), jnp.float32),
        grid=(B,),
        in_specs=[
            pl.BlockSpec(memory_space=pltpu.MemorySpace.SMEM),             # packed scalars
            pl.BlockSpec((pl.Squeezed(), C, HW), lambda b: (b, 0, 0)),     # x, one image/step
            pl.BlockSpec((R, C), lambda b: (0, 0)),                        # fused weight
            pl.BlockSpec((8, HW), lambda b: (0, 0)),                       # boundary masks
            pl.BlockSpec((Cr, 1), lambda b: (0, 0)),                       # tp_b1
            pl.BlockSpec((1, Cr), lambda b: (0, 0)),                       # tp_w2
            pl.BlockSpec((pl.Squeezed(), C, 1), lambda b: (b, 0, 0)),      # channel attention
        ],
        out_specs=pl.BlockSpec((pl.Squeezed(), C, HW), lambda b: (b, 0, 0)),
        compiler_params=pltpu.CompilerParams(
            dimension_semantics=("parallel",),
            vmem_limit_bytes=vmem_limit),
        cost_estimate=cost,
    )(scalars, xr, wfused, masks, tpb1, tpw2, cw)

    return out.reshape(B, C, H, W)


def reference_forward(x, params):
    """Pure-JAX reference mirroring the PyTorch forward (mode='adaptive')."""
    B, C, H, W = x.shape
    Cr = params["ca_w1"].shape[0]
    hp = jax.lax.Precision.HIGHEST
    pooled = jnp.mean(x, axis=(2, 3))
    h1 = jax.nn.relu(pooled @ params["ca_w1"].T + params["ca_b1"])
    cw = jax.nn.sigmoid(h1 @ params["ca_w2"].T + params["ca_b2"])[:, :, None, None]
    sconv = jax.lax.conv_general_dilated(
        x, params["sa_w"], window_strides=(1, 1), padding="SAME",
        dimension_numbers=("NCHW", "OIHW", "NCHW"), precision=hp)
    sw = jax.nn.sigmoid(sconv + params["sa_b"].reshape(1, 1, 1, 1))
    t1 = jax.nn.relu(jnp.einsum("oc,bchw->bohw", params["tp_w1"], x, precision=hp)
                     + params["tp_b1"].reshape(1, Cr, 1, 1))
    rel = jax.nn.sigmoid(jnp.einsum("oc,bchw->bohw", params["tp_w2"], t1, precision=hp)
                         + params["tp_b2"].reshape(1, 1, 1, 1))
    abs_x = jnp.abs(x)
    gthr = jnp.quantile(abs_x.reshape(B, -1), 0.85, axis=1).reshape(B, 1, 1, 1)
    mask = jax.nn.sigmoid((abs_x - gthr * rel) * 10.0)
    return x * mask * cw * sw


def make_params(key, C, reduction_ratio=16):
    Cr = C // reduction_ratio
    ks = jax.random.split(key, 10)
    s = 0.2
    return {
        "ca_w1": s * jax.random.normal(ks[0], (Cr, C), jnp.float32),
        "ca_b1": s * jax.random.normal(ks[1], (Cr,), jnp.float32),
        "ca_w2": s * jax.random.normal(ks[2], (C, Cr), jnp.float32),
        "ca_b2": s * jax.random.normal(ks[3], (C,), jnp.float32),
        "sa_w":  s * jax.random.normal(ks[4], (1, C, 3, 3), jnp.float32),
        "sa_b":  s * jax.random.normal(ks[5], (1,), jnp.float32),
        "tp_w1": s * jax.random.normal(ks[6], (Cr, C), jnp.float32),
        "tp_b1": s * jax.random.normal(ks[7], (Cr,), jnp.float32),
        "tp_w2": s * jax.random.normal(ks[8], (1, Cr), jnp.float32),
        "tp_b2": s * jax.random.normal(ks[9], (1,), jnp.float32),
    }


if __name__ == "__main__":
    B, C, H, W = 2, 32, 16, 16      # in_channels=32, reduction_ratio=16 -> Cr=2
    key = jax.random.PRNGKey(0)
    kx, kp = jax.random.split(key)
    x = jax.random.normal(kx, (B, C, H, W), jnp.float32)
    params = make_params(kp, C, reduction_ratio=16)

    ref = jax.block_until_ready(reference_forward(x, params))
    out = jax.block_until_ready(learnable_feature_filter_adaptive(x, params))

    err = float(jnp.max(jnp.abs(out - ref)))
    assert np.isfinite(err) and err < 2e-3, f"mismatch vs reference: {err}"
    print("KERNEL_OK")
</pallas_src>

<mosaic_0001>
module attributes {stable_mosaic.version = 11 : i64} {
  func.func @_lff_kernel(%arg0: i32, %arg1: memref<4xf32, #tpu.memory_space<smem>>, %arg2: memref<1x32x256xf32, #tpu.memory_space<vmem>>, %arg3: memref<18x32xf32, #tpu.memory_space<vmem>>, %arg4: memref<8x256xf32, #tpu.memory_space<vmem>>, %arg5: memref<2x1xf32, #tpu.memory_space<vmem>>, %arg6: memref<1x2xf32, #tpu.memory_space<vmem>>, %arg7: memref<1x32x1xf32, #tpu.memory_space<vmem>>, %arg8: memref<1x32x256xf32, #tpu.memory_space<vmem>>) attributes {dimension_semantics = [#tpu.dimension_semantics<parallel>], iteration_bounds = array<i64: 2>, scalar_prefetch = 0 : i64, scratch_operands = 0 : i64, tpu.core_type = #tpu.core_type<tc>, window_params = [{transform_indices = @transform_0, window_bounds = array<i64: 4>}, {transform_indices = @transform_1, window_bounds = array<i64: 1, 32, 256>}, {pipeline_mode = #tpu.pipeline_mode<synchronous>, transform_indices = @transform_2, window_bounds = array<i64: 18, 32>}, {pipeline_mode = #tpu.pipeline_mode<synchronous>, transform_indices = @transform_3, window_bounds = array<i64: 8, 256>}, {pipeline_mode = #tpu.pipeline_mode<synchronous>, transform_indices = @transform_4, window_bounds = array<i64: 2, 1>}, {pipeline_mode = #tpu.pipeline_mode<synchronous>, transform_indices = @transform_5, window_bounds = array<i64: 1, 2>}, {transform_indices = @transform_6, window_bounds = array<i64: 1, 32, 1>}, {transform_indices = @transform_7, window_bounds = array<i64: 1, 32, 256>}]} {
    %c0 = arith.constant 0 : index
    %c0_0 = arith.constant 0 : index
    %c0_1 = arith.constant 0 : index
    %0 = vector.load %arg2[%c0, %c0_0, %c0_1] : memref<1x32x256xf32, #tpu.memory_space<vmem>>, vector<1x32x256xf32>
    %1 = vector.shape_cast %0 : vector<1x32x256xf32> to vector<32x256xf32>
    %c0_2 = arith.constant 0 : index
    %c0_3 = arith.constant 0 : index
    %2 = vector.load %arg3[%c0_2, %c0_3] : memref<18x32xf32, #tpu.memory_space<vmem>>, vector<18x32xf32>
    %cst = arith.constant dense<0.000000e+00> : vector<18x256xf32>
    %3 = tpu.matmul %2, %1, %cst {dimension_numbers = #tpu.dot_dimension_numbers<[1], [0], [0], [1], [0, 0, 1, 1], [], []>} : vector<18x32xf32>, vector<32x256xf32>, vector<18x256xf32> -> vector<18x256xf32>
    %4 = vector.extract_strided_slice %3 {offsets = [0, 0], sizes = [8, 256], strides = [1, 1]} : vector<18x256xf32> to vector<8x256xf32>
    %c0_4 = arith.constant 0 : index
    %c0_5 = arith.constant 0 : index
    %5 = vector.load %arg4[%c0_4, %c0_5] : memref<8x256xf32, #tpu.memory_space<vmem>>, vector<8x256xf32>
    %6 = arith.mulf %4, %5 : vector<8x256xf32>
    %7 = vector.extract_strided_slice %3 {offsets = [8, 0], sizes = [1, 256], strides = [1, 1]} : vector<18x256xf32> to vector<1x256xf32>
    %c2 = arith.constant 2 : index
    %8 = memref.load %arg1[%c2] : memref<4xf32, #tpu.memory_space<smem>>
    %9 = vector.broadcast %8 : f32 to vector<1x256xf32>
    %10 = arith.addf %7, %9 : vector<1x256xf32>
    %11 = vector.extract_strided_slice %6 {offsets = [0, 0], sizes = [1, 256], strides = [1, 1]} : vector<8x256xf32> to vector<1x256xf32>
    %c17_i32 = arith.constant 17 : i32
    %12 = tpu.dynamic_rotate %11 by %c17_i32 dim 1 : vector<1x256xf32>, i32 -> vector<1x256xf32>
    %13 = arith.addf %10, %12 : vector<1x256xf32>
    %14 = vector.extract_strided_slice %6 {offsets = [1, 0], sizes = [1, 256], strides = [1, 1]} : vector<8x256xf32> to vector<1x256xf32>
    %c16_i32 = arith.constant 16 : i32
    %15 = tpu.dynamic_rotate %14 by %c16_i32 dim 1 : vector<1x256xf32>, i32 -> vector<1x256xf32>
    %16 = arith.addf %13, %15 : vector<1x256xf32>
    %17 = vector.extract_strided_slice %6 {offsets = [2, 0], sizes = [1, 256], strides = [1, 1]} : vector<8x256xf32> to vector<1x256xf32>
    %c15_i32 = arith.constant 15 : i32
    %18 = tpu.dynamic_rotate %17 by %c15_i32 dim 1 : vector<1x256xf32>, i32 -> vector<1x256xf32>
    %19 = arith.addf %16, %18 : vector<1x256xf32>
    %20 = vector.extract_strided_slice %6 {offsets = [3, 0], sizes = [1, 256], strides = [1, 1]} : vector<8x256xf32> to vector<1x256xf32>
    %c1_i32 = arith.constant 1 : i32
    %21 = tpu.dynamic_rotate %20 by %c1_i32 dim 1 : vector<1x256xf32>, i32 -> vector<1x256xf32>
    %22 = arith.addf %19, %21 : vector<1x256xf32>
    %23 = vector.extract_strided_slice %6 {offsets = [4, 0], sizes = [1, 256], strides = [1, 1]} : vector<8x256xf32> to vector<1x256xf32>
    %c255_i32 = arith.constant 255 : i32
    %24 = tpu.dynamic_rotate %23 by %c255_i32 dim 1 : vector<1x256xf32>, i32 -> vector<1x256xf32>
    %25 = arith.addf %22, %24 : vector<1x256xf32>
    %26 = vector.extract_strided_slice %6 {offsets = [5, 0], sizes = [1, 256], strides = [1, 1]} : vector<8x256xf32> to vector<1x256xf32>
    %c241_i32 = arith.constant 241 : i32
    %27 = tpu.dynamic_rotate %26 by %c241_i32 dim 1 : vector<1x256xf32>, i32 -> vector<1x256xf32>
    %28 = arith.addf %25, %27 : vector<1x256xf32>
    %29 = vector.extract_strided_slice %6 {offsets = [6, 0], sizes = [1, 256], strides = [1, 1]} : vector<8x256xf32> to vector<1x256xf32>
    %c240_i32 = arith.constant 240 : i32
    %30 = tpu.dynamic_rotate %29 by %c240_i32 dim 1 : vector<1x256xf32>, i32 -> vector<1x256xf32>
    %31 = arith.addf %28, %30 : vector<1x256xf32>
    %32 = vector.extract_strided_slice %6 {offsets = [7, 0], sizes = [1, 256], strides = [1, 1]} : vector<8x256xf32> to vector<1x256xf32>
    %c239_i32 = arith.constant 239 : i32
    %33 = tpu.dynamic_rotate %32 by %c239_i32 dim 1 : vector<1x256xf32>, i32 -> vector<1x256xf32>
    %34 = arith.addf %31, %33 : vector<1x256xf32>
    %cst_6 = arith.constant 5.000000e-01 : f32
    %35 = vector.broadcast %cst_6 : f32 to vector<1x256xf32>
    %36 = arith.mulf %35, %34 : vector<1x256xf32>
    %37 = math.tanh %36 : vector<1x256xf32>
    %cst_7 = arith.constant 1.000000e+00 : f32
    %38 = vector.broadcast %cst_7 : f32 to vector<1x256xf32>
    %39 = arith.addf %38, %37 : vector<1x256xf32>
    %cst_8 = arith.constant 5.000000e-01 : f32
    %40 = vector.broadcast %cst_8 : f32 to vector<1x256xf32>
    %41 = arith.mulf %40, %39 : vector<1x256xf32>
    %42 = vector.extract_strided_slice %3 {offsets = [16, 0], sizes = [2, 256], strides = [1, 1]} : vector<18x256xf32> to vector<2x256xf32>
    %c0_9 = arith.constant 0 : index
    %c0_10 = arith.constant 0 : index
    %43 = vector.load %arg5[%c0_9, %c0_10] : memref<2x1xf32, #tpu.memory_space<vmem>>, vector<2x1xf32>
    %44 = vector.broadcast %43 : vector<2x1xf32> to vector<2x256xf32>
    %45 = arith.addf %42, %44 : vector<2x256xf32>
    %cst_11 = arith.constant 0.000000e+00 : f32
    %46 = vector.broadcast %cst_11 : f32 to vector<2x256xf32>
    %47 = arith.maximumf %45, %46 : vector<2x256xf32>
    %c0_12 = arith.constant 0 : index
    %c0_13 = arith.constant 0 : index
    %48 = vector.load %arg6[%c0_12, %c0_13] : memref<1x2xf32, #tpu.memory_space<vmem>>, vector<1x2xf32>
    %cst_14 = arith.constant dense<0.000000e+00> : vector<1x256xf32>
    %49 = tpu.matmul %48, %47, %cst_14 {dimension_numbers = #tpu.dot_dimension_numbers<[1], [0], [0], [1], [0, 0, 1, 1], [], []>} : vector<1x2xf32>, vector<2x256xf32>, vector<1x256xf32> -> vector<1x256xf32>
    %c3 = arith.constant 3 : index
    %50 = memref.load %arg1[%c3] : memref<4xf32, #tpu.memory_space<smem>>
    %51 = vector.broadcast %50 : f32 to vector<1x256xf32>
    %52 = arith.addf %49, %51 : vector<1x256xf32>
    %cst_15 = arith.constant 5.000000e-01 : f32
    %53 = vector.broadcast %cst_15 : f32 to vector<1x256xf32>
    %54 = arith.mulf %53, %52 : vector<1x256xf32>
    %55 = math.tanh %54 : vector<1x256xf32>
    %cst_16 = arith.constant 1.000000e+00 : f32
    %56 = vector.broadcast %cst_16 : f32 to vector<1x256xf32>
    %57 = arith.addf %56, %55 : vector<1x256xf32>
    %cst_17 = arith.constant 5.000000e-01 : f32
    %58 = vector.broadcast %cst_17 : f32 to vector<1x256xf32>
    %59 = arith.mulf %58, %57 : vector<1x256xf32>
    %60 = math.absf %1 : vector<32x256xf32>
    %61 = arith.index_cast %arg0 : i32 to index
    %62 = memref.load %arg1[%61] : memref<4xf32, #tpu.memory_space<smem>>
    %63 = vector.broadcast %62 : f32 to vector<1x256xf32>
    %64 = arith.mulf %63, %59 : vector<1x256xf32>
    %65 = vector.broadcast %64 : vector<1x256xf32> to vector<32x256xf32>
    %66 = arith.subf %60, %65 : vector<32x256xf32>
    %cst_18 = arith.constant 1.000000e+01 : f32
    %67 = vector.broadcast %cst_18 : f32 to vector<32x256xf32>
    %68 = arith.mulf %66, %67 : vector<32x256xf32>
    %cst_19 = arith.constant 5.000000e-01 : f32
    %69 = vector.broadcast %cst_19 : f32 to vector<32x256xf32>
    %70 = arith.mulf %69, %68 : vector<32x256xf32>
    %71 = math.tanh %70 : vector<32x256xf32>
    %cst_20 = arith.constant 1.000000e+00 : f32
    %72 = vector.broadcast %cst_20 : f32 to vector<32x256xf32>
    %73 = arith.addf %72, %71 : vector<32x256xf32>
    %cst_21 = arith.constant 5.000000e-01 : f32
    %74 = vector.broadcast %cst_21 : f32 to vector<32x256xf32>
    %75 = arith.mulf %74, %73 : vector<32x256xf32>
    %76 = arith.mulf %1, %75 : vector<32x256xf32>
    %c0_22 = arith.constant 0 : index
    %c0_23 = arith.constant 0 : index
    %c0_24 = arith.constant 0 : index
    %77 = vector.load %arg7[%c0_22, %c0_23, %c0_24] : memref<1x32x1xf32, #tpu.memory_space<vmem>>, vector<1x32x1xf32>
    %78 = vector.shape_cast %77 : vector<1x32x1xf32> to vector<32x1xf32>
    %79 = vector.broadcast %78 : vector<32x1xf32> to vector<32x256xf32>
    %80 = arith.mulf %76, %79 : vector<32x256xf32>
    %81 = vector.broadcast %41 : vector<1x256xf32> to vector<32x256xf32>
    %82 = arith.mulf %80, %81 : vector<32x256xf32>
    %c0_25 = arith.constant 0 : index
    %c0_26 = arith.constant 0 : index
    %c0_27 = arith.constant 0 : index
    %83 = vector.load %arg8[%c0_25, %c0_26, %c0_27] : memref<1x32x256xf32, #tpu.memory_space<vmem>>, vector<1x32x256xf32>
    %84 = vector.shape_cast %83 : vector<1x32x256xf32> to vector<32x256xf32>
    %85 = vector.shape_cast %82 : vector<32x256xf32> to vector<1x32x256xf32>
    tpu.vector_store %arg8[%c0_25, %c0_26, %c0_27], %85 {strides = array<i32>} : memref<1x32x256xf32, #tpu.memory_space<vmem>>, vector<1x32x256xf32>,
    return
  }
  func.func @transform_0(%arg0: i32) -> i32 {
    %c0_i32 = arith.constant 0 : i32
    %c0_i32_0 = arith.constant 0 : i32
    return %c0_i32 : i32
  }
  func.func @transform_1(%arg0: i32) -> (i32, i32, i32) {
    %c0_i32 = arith.constant 0 : i32
    %c0_i32_0 = arith.constant 0 : i32
    %c0_i32_1 = arith.constant 0 : i32
    return %arg0, %c0_i32, %c0_i32_0 : i32, i32, i32
  }
  func.func @transform_2(%arg0: i32) -> (i32, i32) {
    %c0_i32 = arith.constant 0 : i32
    %c0_i32_0 = arith.constant 0 : i32
    %c0_i32_1 = arith.constant 0 : i32
    return %c0_i32, %c0_i32_0 : i32, i32
  }
  func.func @transform_3(%arg0: i32) -> (i32, i32) {
    %c0_i32 = arith.constant 0 : i32
    %c0_i32_0 = arith.constant 0 : i32
    %c0_i32_1 = arith.constant 0 : i32
    return %c0_i32, %c0_i32_0 : i32, i32
  }
  func.func @transform_4(%arg0: i32) -> (i32, i32) {
    %c0_i32 = arith.constant 0 : i32
    %c0_i32_0 = arith.constant 0 : i32
    %c0_i32_1 = arith.constant 0 : i32
    return %c0_i32, %c0_i32_0 : i32, i32
  }
  func.func @transform_5(%arg0: i32) -> (i32, i32) {
    %c0_i32 = arith.constant 0 : i32
    %c0_i32_0 = arith.constant 0 : i32
    %c0_i32_1 = arith.constant 0 : i32
    return %c0_i32, %c0_i32_0 : i32, i32
  }
  func.func @transform_6(%arg0: i32) -> (i32, i32, i32) {
    %c0_i32 = arith.constant 0 : i32
    %c0_i32_0 = arith.constant 0 : i32
    %c0_i32_1 = arith.constant 0 : i32
    return %arg0, %c0_i32, %c0_i32_0 : i32, i32, i32
  }
  func.func @transform_7(%arg0: i32) -> (i32, i32, i32) {
    %c0_i32 = arith.constant 0 : i32
    %c0_i32_0 = arith.constant 0 : i32
    %c0_i32_1 = arith.constant 0 : i32
    return %arg0, %c0_i32, %c0_i32_0 : i32, i32, i32
  }
}

</mosaic_0001>

<llo_original>
// kernel: tpu_custom_call.1
$region0: #{tpu_custom_call.1}
  #allocation0 [shape = 'u32[]', space=smem, size = 0x4, offset = 0x4, fixed_abs, tag = 'smem constant byte address 0x4 - core index']
  #allocation1 [shape = 'u32[144,128]{1,0:T(1,128)}', space=vmem, size = 0x12000, scoped, tag = 'internal scratch']
  %s0 = inlined_call_operand.vmem [shape: f32[4], index: 0, kind: input, shape index: {}]
  %s1 = inlined_call_operand.hbm [shape: f32[2,32,256], index: 1, kind: input, shape index: {}]
  %s2 = inlined_call_operand.vmem [shape: f32[18,32], index: 2, kind: input, shape index: {}]
  %s3 = inlined_call_operand.vmem [shape: f32[8,256], index: 3, kind: input, shape index: {}]
  %s4 = inlined_call_operand.vmem [shape: f32[2,1], index: 4, kind: input, shape index: {}]
  %s5 = inlined_call_operand.vmem [shape: f32[1,2], index: 5, kind: input, shape index: {}]
  %s6 = inlined_call_operand.vmem [shape: f32[2,32,1], index: 6, kind: input, shape index: {}]
  %s7 = inlined_call_operand.hbm [shape: f32[2,32,256], index: 7, kind: output, shape index: {}]
  %s8 = sld [smem:[#allocation0]]
  $region69: #{tpu_custom_call.1} parent=0
    _
  %s10 = ssub.s32 1, %s8
  %s11 = scalar_select 0, %s10, %s8
  $region1: #{tpu_custom_call.1} parent=0
    #allocation2 [shape = 'u8[512]{0}', space=smem, size = 0x200, scoped, tag = 'input window, operand 0, single buffered']
    #allocation3 [shape = 's32[2]{0}', space=sflag, size = 0x8, scoped, tag = 'scoped memory for tpu_custom_call.1']
    #allocation4 [shape = 's32[2]{0}', space=sflag, size = 0x8, scoped, tag = 'scoped memory for tpu_custom_call.1']
    #allocation5 [shape = 's32[2]{0}', space=sflag, size = 0x8, scoped, tag = 'scoped memory for tpu_custom_call.1']
    #allocation6 [shape = 'u8[65536]{0}', space=vmem, size = 0x10000, scoped, tag = 'input window, operand 1']
    #allocation7 [shape = 'u8[65536]{0}', space=vmem, size = 0x10000, scoped, tag = 'output window, operand 0']
    %12 = vsyncpa [#allocation5], 0
    %13 = vsyncpa [#allocation3], 0
    %s14 = scalar_lea.sflag [#allocation3], 1
    %15 = vsyncpa %s14, 0
    %16 = vsyncpa [#allocation4], 0
    %s17 = scalar_lea.sflag [#allocation4], 1
    %18 = vsyncpa %s17, 0
    loop: start=0, step=1, limit=4
    $region2: #{tpu_custom_call.1} parent=1 // loop_pre_header
      _
    $region3: #{tpu_custom_call.1} parent=1 // loop_header
      %s20 = sphi 0, %s24
      %p21 = scmp.ge.s32.totalorder %s20, 4
      %s28 = sphi 0, %s28
      %s30 = sphi 0, %s28
      %s31 = sphi 0, %s30
      %s45 = sphi 0, %s31
      %s51 = sphi 0, %s53
      %s54 = sphi 0, %s51
      %s55 = sphi 0, %s54
      %s71 = sphi 0, %s55
      %s75 = sphi 0, %s75
      %s77 = sphi 0, %s75
      %s78 = sphi 0, %s77
      %s92 = sphi 0, %s78
      %s96 = sphi 0, %s96
      %s98 = sphi 0, %s96
      %s99 = sphi 0, %s98
      %s113 = sphi 0, %s99
      %s117 = sphi 0, %s117
      %s119 = sphi 0, %s117
      %s120 = sphi 0, %s119
      %s134 = sphi 0, %s120
      %s138 = sphi 0, %s138
      %s140 = sphi 0, %s138
      %s141 = sphi 0, %s140
      %s155 = sphi 0, %s141
      %s161 = sphi 0, %s163
      %s164 = sphi 0, %s161
      %s165 = sphi 0, %s164
      %s181 = sphi 0, %s165
      %s187 = sphi 0, %s189
      %s190 = sphi 0, %s187
      %s191 = sphi 0, %s190
      %s207 = sphi 0, %s191
    $region4: #{tpu_custom_call.1} parent=1 // loop_header_branch
      %23 = sbr.rel (%p21) target = $region8
    $region5: #{tpu_custom_call.1} parent=1 // loop_body
      %s25 = ssub.s32 %s20, 1
      %s26 = ssub.s32 %s20, 2
      %s27 = sadd.s32 %s20, 1
      %s29 = sadd.s32 %s28, 1
      %p32 = scmp.eq.s32.totalorder %s20, 1
      %p33 = scmp.ne.s32.totalorder %s28, %s30
      %p34 = scmp.eq.s32.totalorder %s20, 0
      %p35 = por %p33, %p34
      %p36 = scmp.ne.s32.totalorder %s28, %s30
      %p37 = scmp.eq.s32.totalorder %s25, 1
      %p38 = por %p36, %p37
      %p39 = scmp.ne.s32.totalorder %s30, %s31
      %p40 = scmp.eq.s32.totalorder %s25, 0
      %p41 = por %p39, %p40
      %p42 = scmp.ne.s32.totalorder %s30, %s31
      %p43 = scmp.eq.s32.totalorder %s26, 1
      %p44 = por %p42, %p43
      %p46 = scmp.ne.s32.totalorder %s31, %s45
      %p47 = scmp.eq.s32.totalorder %s26, 0
      %p48 = por %p46, %p47
      %s49 = ssub.s32 %s20, %s27
      %p50 = scmp.eq.s32.totalorder %s49, 0
      %s52 = sadd.s32 %s51, 1
      %s53 = scalar_select %p50, %s51, %s52
      %p56 = pneg %p50
      %p57 = scmp.eq.s32.totalorder %s20, 1
      %p58 = por %p56, %p57
      %p59 = scmp.ne.s32.totalorder %s51, %s54
      %p60 = scmp.eq.s32.totalorder %s20, 0
      %p61 = por %p59, %p60
      %p62 = scmp.ne.s32.totalorder %s51, %s54
      %p63 = scmp.eq.s32.totalorder %s25, 1
      %p64 = por %p62, %p63
      %p65 = scmp.ne.s32.totalorder %s54, %s55
      %p66 = scmp.eq.s32.totalorder %s25, 0
      %p67 = por %p65, %p66
      %p68 = scmp.ne.s32.totalorder %s54, %s55
      %p69 = scmp.eq.s32.totalorder %s26, 1
      %p70 = por %p68, %p69
      %p72 = scmp.ne.s32.totalorder %s55, %s71
      %p73 = scmp.eq.s32.totalorder %s26, 0
      %p74 = por %p72, %p73
      %s76 = sadd.s32 %s75, 1
      %p79 = scmp.eq.s32.totalorder %s20, 1
      %p80 = scmp.ne.s32.totalorder %s75, %s77
      %p81 = scmp.eq.s32.totalorder %s20, 0
      %p82 = por %p80, %p81
      %p83 = scmp.ne.s32.totalorder %s75, %s77
      %p84 = scmp.eq.s32.totalorder %s25, 1
      %p85 = por %p83, %p84
      %p86 = scmp.ne.s32.totalorder %s77, %s78
      %p87 = scmp.eq.s32.totalorder %s25, 0
      %p88 = por %p86, %p87
      %p89 = scmp.ne.s32.totalorder %s77, %s78
      %p90 = scmp.eq.s32.totalorder %s26, 1
      %p91 = por %p89, %p90
      %p93 = scmp.ne.s32.totalorder %s78, %s92
      %p94 = scmp.eq.s32.totalorder %s26, 0
      %p95 = por %p93, %p94
      %s97 = sadd.s32 %s96, 1
      %p100 = scmp.eq.s32.totalorder %s20, 1
      %p101 = scmp.ne.s32.totalorder %s96, %s98
      %p102 = scmp.eq.s32.totalorder %s20, 0
      %p103 = por %p101, %p102
      %p104 = scmp.ne.s32.totalorder %s96, %s98
      %p105 = scmp.eq.s32.totalorder %s25, 1
      %p106 = por %p104, %p105
      %p107 = scmp.ne.s32.totalorder %s98, %s99
      %p108 = scmp.eq.s32.totalorder %s25, 0
      %p109 = por %p107, %p108
      %p110 = scmp.ne.s32.totalorder %s98, %s99
      %p111 = scmp.eq.s32.totalorder %s26, 1
      %p112 = por %p110, %p111
      %p114 = scmp.ne.s32.totalorder %s99, %s113
      %p115 = scmp.eq.s32.totalorder %s26, 0
      %p116 = por %p114, %p115
      %s118 = sadd.s32 %s117, 1
      %p121 = scmp.eq.s32.totalorder %s20, 1
      %p122 = scmp.ne.s32.totalorder %s117, %s119
      %p123 = scmp.eq.s32.totalorder %s20, 0
      %p124 = por %p122, %p123
      %p125 = scmp.ne.s32.totalorder %s117, %s119
      %p126 = scmp.eq.s32.totalorder %s25, 1
      %p127 = por %p125, %p126
      %p128 = scmp.ne.s32.totalorder %s119, %s120
      %p129 = scmp.eq.s32.totalorder %s25, 0
      %p130 = por %p128, %p129
      %p131 = scmp.ne.s32.totalorder %s119, %s120
      %p132 = scmp.eq.s32.totalorder %s26, 1
      %p133 = por %p131, %p132
      %p135 = scmp.ne.s32.totalorder %s120, %s134
      %p136 = scmp.eq.s32.totalorder %s26, 0
      %p137 = por %p135, %p136
      %s139 = sadd.s32 %s138, 1
      %p142 = scmp.eq.s32.totalorder %s20, 1
      %p143 = scmp.ne.s32.totalorder %s138, %s140
      %p144 = scmp.eq.s32.totalorder %s20, 0
      %p145 = por %p143, %p144
      %p146 = scmp.ne.s32.totalorder %s138, %s140
      %p147 = scmp.eq.s32.totalorder %s25, 1
      %p148 = por %p146, %p147
      %p149 = scmp.ne.s32.totalorder %s140, %s141
      %p150 = scmp.eq.s32.totalorder %s25, 0
      %p151 = por %p149, %p150
      %p152 = scmp.ne.s32.totalorder %s140, %s141
      %p153 = scmp.eq.s32.totalorder %s26, 1
      %p154 = por %p152, %p153
      %p156 = scmp.ne.s32.totalorder %s141, %s155
      %p157 = scmp.eq.s32.totalorder %s26, 0
      %p158 = por %p156, %p157
      %s159 = ssub.s32 %s20, %s27
      %p160 = scmp.eq.s32.totalorder %s159, 0
      %s162 = sadd.s32 %s161, 1
      %s163 = scalar_select %p160, %s161, %s162
      %p166 = pneg %p160
      %p167 = scmp.eq.s32.totalorder %s20, 1
      %p168 = por %p166, %p167
      %p169 = scmp.ne.s32.totalorder %s161, %s164
      %p170 = scmp.eq.s32.totalorder %s20, 0
      %p171 = por %p169, %p170
      %p172 = scmp.ne.s32.totalorder %s161, %s164
      %p173 = scmp.eq.s32.totalorder %s25, 1
      %p174 = por %p172, %p173
      %p175 = scmp.ne.s32.totalorder %s164, %s165
      %p176 = scmp.eq.s32.totalorder %s25, 0
      %p177 = por %p175, %p176
      %p178 = scmp.ne.s32.totalorder %s164, %s165
      %p179 = scmp.eq.s32.totalorder %s26, 1
      %p180 = por %p178, %p179
      %p182 = scmp.ne.s32.totalorder %s165, %s181
      %p183 = scmp.eq.s32.totalorder %s26, 0
      %p184 = por %p182, %p183
      %s185 = ssub.s32 %s20, %s27
      %p186 = scmp.eq.s32.totalorder %s185, 0
      %s188 = sadd.s32 %s187, 1
      %s189 = scalar_select %p186, %s187, %s188
      %p192 = pneg %p186
      %p193 = scmp.eq.s32.totalorder %s20, 1
      %p194 = por %p192, %p193
      %p195 = scmp.ne.s32.totalorder %s187, %s190
      %p196 = scmp.eq.s32.totalorder %s20, 0
      %p197 = por %p195, %p196
      %p198 = scmp.ne.s32.totalorder %s187, %s190
      %p199 = scmp.eq.s32.totalorder %s25, 1
      %p200 = por %p198, %p199
      %p201 = scmp.ne.s32.totalorder %s190, %s191
      %p202 = scmp.eq.s32.totalorder %s25, 0
      %p203 = por %p201, %p202
      %p204 = scmp.ne.s32.totalorder %s190, %s191
      %p205 = scmp.eq.s32.totalorder %s26, 1
      %p206 = por %p204, %p205
      %p208 = scmp.ne.s32.totalorder %s191, %s207
      %p209 = scmp.eq.s32.totalorder %s26, 0
      %p210 = por %p208, %p209
      %p211 = scmp.le.s32.totalorder 1, %s20
      %p212 = scmp.lt.s32.totalorder %s20, 3
      %p213 = pnand %p211, %p212
      %p214 = pneg %p213
      // Predicated region
      $region9: #{tpu_custom_call.1} parent=5 // pred_check
        _
      $region10: #{tpu_custom_call.1} parent=5 // pred_check_branch
        %216 = sbr.rel (%p213) target = $region12
      $region11: #{tpu_custom_call.1} parent=5 // pred_region
        %s217 = ssub.s32 %s20, 1
        // Predicated region
        $region13: #{tpu_custom_call.1} parent=11 // pred_check
          %p218 = pneg %p41
        $region14: #{tpu_custom_call.1} parent=11 // pred_check_branch
          %220 = sbr.rel (%p218) target = $region16
        $region15: #{tpu_custom_call.1} parent=11 // pred_region
          %s222 = ssub.s32 16, 16
          %223 = vsyncadd [#allocation5], %s222
          %s225 = sshll.u32 %s0, 4
          %s226 = int_to_ptr.vmem [resolvable:$true] %s225
          %228 = dma.vmem_to_smem %s226, 16, [#allocation2], [#allocation5]
        $region16: #{tpu_custom_call.1} parent=11 // pred_fallthru
          _
        // Predicated region
        $region17: #{tpu_custom_call.1} parent=11 // pred_check
          %p229 = pneg %p88
        $region18: #{tpu_custom_call.1} parent=11 // pred_check_branch
          %231 = sbr.rel (%p229) target = $region20
        $region19: #{tpu_custom_call.1} parent=11 // pred_region
          _
        $region20: #{tpu_custom_call.1} parent=11 // pred_fallthru
          _
        // Predicated region
        $region21: #{tpu_custom_call.1} parent=11 // pred_check
          %p232 = pneg %p109
        $region22: #{tpu_custom_call.1} parent=11 // pred_check_branch
          %234 = sbr.rel (%p232) target = $region24
        $region23: #{tpu_custom_call.1} parent=11 // pred_region
          _
        $region24: #{tpu_custom_call.1} parent=11 // pred_fallthru
          _
        // Predicated region
        $region25: #{tpu_custom_call.1} parent=11 // pred_check
          %p235 = pneg %p130
        $region26: #{tpu_custom_call.1} parent=11 // pred_check_branch
          %237 = sbr.rel (%p235) target = $region28
        $region27: #{tpu_custom_call.1} parent=11 // pred_region
          _
        $region28: #{tpu_custom_call.1} parent=11 // pred_fallthru
          _
        // Predicated region
        $region29: #{tpu_custom_call.1} parent=11 // pred_check
          %p238 = pneg %p151
        $region30: #{tpu_custom_call.1} parent=11 // pred_check_branch
          %240 = sbr.rel (%p238) target = $region32
        $region31: #{tpu_custom_call.1} parent=11 // pred_region
          _
        $region32: #{tpu_custom_call.1} parent=11 // pred_fallthru
          _
      $region12: #{tpu_custom_call.1} parent=5 // pred_fallthru
        _
      %p241 = scmp.lt.s32.totalorder %s20, 2
      // Predicated region
      $region33: #{tpu_custom_call.1} parent=5 // pred_check
        %p242 = pneg %p241
      $region34: #{tpu_custom_call.1} parent=5 // pred_check_branch
        %244 = sbr.rel (%p242) target = $region36
      $region35: #{tpu_custom_call.1} parent=5 // pred_region
        // Predicated region
        $region37: #{tpu_custom_call.1} parent=35 // pred_check
          %p245 = pneg %p61
        $region38: #{tpu_custom_call.1} parent=35 // pred_check_branch
          %247 = sbr.rel (%p245) target = $region40
        $region39: #{tpu_custom_call.1} parent=35 // pred_region
          %s248 = sand.u32 %s51, 1
          %s249 = scalar_lea.sflag [#allocation3], %s248
          %s250 = sand.u32 %s51, 1
          %s251 = smul.addr %s250, 64
          %s252 = scalar_lea.vmem [#allocation6], %s251
          %s254 = ssub.s32 1024, 1024
          %255 = vsyncadd %s249, %s254
          %s256 = smul.addr %s20, 8
          %s257 = smul.addr %s256, 128
          %s258 = scalar_lea.hbm %s1, %s257
          %s259 = sshll.u32 %s252, 4
          %s260 = int_to_ptr.vmem [resolvable:$true] %s259
          %265 = dma.hbm_to_vmem [thread:$0]  %s258, 1024, %s260, %s249, 256, 256, 16
        $region40: #{tpu_custom_call.1} parent=35 // pred_fallthru
          _
        // Predicated region
        $region41: #{tpu_custom_call.1} parent=35 // pred_check
          %p266 = pneg %p171
        $region42: #{tpu_custom_call.1} parent=35 // pred_check_branch
          %268 = sbr.rel (%p266) target = $region44
        $region43: #{tpu_custom_call.1} parent=35 // pred_region
          %p269 = scmp.lt.s32.totalorder %s20, 1
          %s270 = scalar_select %p269, %s20, 1
          %s271 = smul.addr %s270, 4
          %s272 = smul.addr %s271, 8
          %s273 = scalar_lea.vmem %s6, %s272
        $region44: #{tpu_custom_call.1} parent=35 // pred_fallthru
          _
      $region36: #{tpu_custom_call.1} parent=5 // pred_fallthru
        _
      %p274 = scmp.le.s32.totalorder 1, %s20
      %p275 = scmp.lt.s32.totalorder %s20, 3
      %p276 = pnand %p274, %p275
      %p277 = pneg %p276
      // Predicated region
      $region45: #{tpu_custom_call.1} parent=5 // pred_check
        _
      $region46: #{tpu_custom_call.1} parent=5 // pred_check_branch
        %279 = sbr.rel (%p276) target = $region48
      $region47: #{tpu_custom_call.1} parent=5 // pred_region
        %s280 = ssub.s32 %s20, 1
        // Predicated region
        $region49: #{tpu_custom_call.1} parent=47 // pred_check
          %p281 = pneg %p41
        $region50: #{tpu_custom_call.1} parent=47 // pred_check_branch
          %283 = sbr.rel (%p281) target = $region52
        $region51: #{tpu_custom_call.1} parent=47 // pred_region
          %284 = dma.done [#allocation5], 16
        $region52: #{tpu_custom_call.1} parent=47 // pred_fallthru
          _
        %s285 = sand.u32 %s54, 1
        %s286 = scalar_lea.sflag [#allocation3], %s285
        %s287 = sand.u32 %s54, 1
        %s288 = smul.addr %s287, 64
        %s289 = scalar_lea.vmem [#allocation6], %s288
        // Predicated region
        $region53: #{tpu_custom_call.1} parent=47 // pred_check
          %p290 = pneg %p67
        $region54: #{tpu_custom_call.1} parent=47 // pred_check_branch
          %292 = sbr.rel (%p290) target = $region56
        $region55: #{tpu_custom_call.1} parent=47 // pred_region
          %293 = dma.done %s286, 1024
        $region56: #{tpu_custom_call.1} parent=47 // pred_fallthru
          _
        %294 = sfence
        %p295 = pneg %p41
        %p296 = pneg %p38
        %s297 = sand.u32 %s54, 1
        %s298 = scalar_lea.sflag [#allocation3], %s297
        %s299 = sand.u32 %s54, 1
        %s300 = smul.addr %s299, 64
        %s301 = scalar_lea.vmem [#allocation6], %s300
        %p302 = pneg %p67
        %p303 = pneg %p64
        %p304 = pneg %p88
        %p305 = pneg %p85
        %p306 = pneg %p109
        %p307 = pneg %p106
        %p308 = pneg %p130
        %p309 = pneg %p127
        %p310 = pneg %p151
        %p311 = pneg %p148
        %p312 = scmp.lt.s32.totalorder %s25, 1
        %s313 = scalar_select %p312, %s25, 1
        %s314 = smul.addr %s313, 4
        %s315 = smul.addr %s314, 8
        %s316 = scalar_lea.vmem %s6, %s315
        %p317 = pneg %p177
        %p318 = pneg %p174
        %p319 = pneg %p203
        %p320 = pneg %p200
        %s321 = sand.u32 %s190, 1
        %s322 = scalar_lea.sflag [#allocation4], %s321
        %s323 = sand.u32 %s190, 1
        %s324 = smul.addr %s323, 64
        %s325 = scalar_lea.vmem [#allocation7], %s324
        %p326 = scmp.lt.s32.totalorder %s25, 1
        %s327 = scalar_select %p326, %s25, 1
        %s328 = smul.addr %s327, 4
        %s329 = smul.addr %s328, 8
        %s330 = scalar_lea.vmem %s6, %s329
        %v331 = vld [vmem:[%s289] sm:$0xff]
        %v332 = vld [vmem:[%s289 + $0x8] sm:$0xff]
        %v333 = vld [vmem:[%s289 + $0x10] sm:$0xff]
        %v334 = vld [vmem:[%s289 + $0x18] sm:$0xff]
        %v335 = vld [vmem:[%s289 + $0x20] sm:$0xff]
        %v336 = vld [vmem:[%s289 + $0x28] sm:$0xff]
        %v337 = vld [vmem:[%s289 + $0x30] sm:$0xff]
        %v338 = vld [vmem:[%s289 + $0x38] sm:$0xff]
        %v339 = vld [vmem:[%s2] sm:$0xff]
        %v340 = vld [vmem:[%s2 + $0x8] sm:$0xff]
        %v341 = vld [vmem:[%s2 + $0x10] sm:$0x3]
        %vm342 = vcmask 261120
        %v344 = vsel %vm342, %v339, 0
        %v347 = vsel %vm342, %v340, 0
        %v350 = vsel %vm342, %v341, 0
        %352 = vmatprep.subr.mxu0 0.0
        %353 = vmatpush1.msra.mxu0 0.0
        %354 = vmatprep.subr.mxu0 0.0
        %355 = vmatpush1.msra.mxu0 0.0
        %356 = vmatprep.subr.mxu0 0.0
        %357 = vmatpush1.msra.mxu0 0.0
        %358 = vmatprep.subr.mxu0 0.0
        %359 = vmatpush1.msra.mxu0 0.0
        %360 = vmatprep.subr.mxu0 0.0
        %361 = vmatpush1.msra.mxu0 0.0
        %362 = vmatprep.subr.mxu0 0.0
        %363 = vmatpush1.msra.mxu0 0.0
        %364 = vmatprep.subr.mxu0 0.0
        %365 = vmatpush1.msra.mxu0 0.0
        %366 = vmatprep.subr.mxu0 0.0
        %367 = vmatpush1.msra.mxu0 0.0
        %368 = vmatprep.subr.mxu0 0.0
        %369 = vmatpush1.msra.mxu0 0.0
        %370 = vmatprep.subr.mxu0 0.0
        %371 = vmatpush1.msra.mxu0 0.0
        %372 = vmatprep.subr.mxu0 0.0
        %373 = vmatpush1.msra.mxu0 0.0
        %374 = vmatprep.subr.mxu0 0.0
        %375 = vmatpush1.msra.mxu0 0.0
        %376 = vmatprep.subr.mxu0 %v338
        %377 = vmatpush1.msra.mxu0 %v337
        %378 = vmatprep.subr.mxu0 %v336
        %379 = vmatpush1.msra.mxu0 %v335
        %380 = vmatprep.subr.mxu0 %v334
        %381 = vmatpush1.msra.mxu0 %v333
        %382 = vmatprep.subr.mxu0 %v332
        %383 = vmatpush1.msra.mxu0 %v331
        %384 = vmatprep.subr.mxu0 0.0
        %385 = vmatpush2.msra.mxu0 0.0
        %386 = vmatprep.subr.mxu0 0.0
        %387 = vmatpush2.msra.mxu0 0.0
        %388 = vmatprep.subr.mxu0 0.0
        %389 = vmatpush2.msra.mxu0 0.0
        %390 = vmatprep.subr.mxu0 0.0
        %391 = vmatpush2.msra.mxu0 0.0
        %392 = vmatprep.subr.mxu0 0.0
        %393 = vmatpush2.msra.mxu0 0.0
        %394 = vmatprep.subr.mxu0 0.0
        %395 = vmatpush2.msra.mxu0 0.0
        %396 = vmatprep.subr.mxu0 0.0
        %397 = vmatpush2.msra.mxu0 0.0
        %398 = vmatprep.subr.mxu0 0.0
        %399 = vmatpush2.msra.mxu0 0.0
        %400 = vmatprep.subr.mxu0 0.0
        %401 = vmatpush2.msra.mxu0 0.0
        %402 = vmatprep.subr.mxu0 0.0
        %403 = vmatpush2.msra.mxu0 0.0
        %404 = vmatprep.subr.mxu0 0.0
        %405 = vmatpush2.msra.mxu0 0.0
        %406 = vmatprep.subr.mxu0 0.0
        %407 = vmatpush2.msra.mxu0 0.0
        %408 = vmatprep.subr.mxu0 0.0
        %409 = vmatpush2.msra.mxu0 0.0
        %410 = vmatprep.subr.mxu0 0.0
        %411 = vmatpush2.msra.mxu0 0.0
        %412 = vmatprep.subr.mxu0 0.0
        %413 = vmatpush2.msra.mxu0 0.0
        %414 = vmatprep.subr.mxu0 0.0
        %415 = vmatpush2.msra.mxu0 0.0
        %416 = vmatprep.mubr.f32.mxu0 0.0
        %417 = vmatmul.mubr.f32.gmra.mxu0 %v344
        %v418 = vpop.f32.mrf.mxu0
        %v419 = vadd.f32 0.0, %v418
        %v420 = vpop.f32.mrf.mxu0
        %v421 = vadd.f32 0.0, %v420
        %422 = vmatprep.mubr.f32.mxu0 0.0
        %423 = vmatmul.mubr.f32.gmra.mxu0 %v347
        %v424 = vpop.f32.mrf.mxu0
        %v425 = vadd.f32 0.0, %v424
        %v426 = vpop.f32.mrf.mxu0
        %v427 = vadd.f32 0.0, %v426
        %428 = vmatprep.mubr.f32.mxu0 0.0
        %429 = vmatmul.mubr.f32.gmra.mxu0 %v350
        %v430 = vpop.f32.mrf.mxu0
        %v431 = vadd.f32 0.0, %v430
        %v432 = vpop.f32.mrf.mxu0
        %v433 = vadd.f32 0.0, %v432
        %434 = vdwg.mxu0
        %v435 = vld [vmem:[%s3] sm:$0xff]
        %v436 = vld [vmem:[%s3 + $0x8] sm:$0xff]
        %v437 = vmul.f32 %v419, %v435
        %v438 = vmul.f32 %v421, %v436
        %s439 = sld [smem:[#allocation2 + $0x2]]
        %v440 = vstv %s439
        %v441 = vadd.f32 %v425, %v440
        %v442 = vadd.f32 %v427, %v440
        %443 = vrot.lane.b32.xlu0 %v437, 17
        %v444 = vpop.permute.xlu0 %443
        %445 = vrot.lane.b32.xlu0 %v438, 17
        %v446 = vpop.permute.xlu0 %445
        %v447 = vlaneseq
        %v448 = vand.u32 %v447, 127
        %vm449 = vcmp.lt.s32.totalorder %v448, 17
        %v450 = vsel %vm449, %v444, %v446
        %v451 = vsel %vm449, %v446, %v444
        %v452 = vadd.f32 %v441, %v451
        %v453 = vadd.f32 %v442, %v450
        %v456 = vrot.slane %v437, 1
        %v457 = vrot.slane %v438, 1
        %460 = vrot.lane.b32.xlu0 %v456, 16
        %v461 = vpop.permute.xlu0 %460
        %462 = vrot.lane.b32.xlu0 %v457, 16
        %v463 = vpop.permute.xlu0 %462
        %vm464 = vcmp.lt.s32.totalorder %v448, 16
        %v465 = vsel %vm464, %v461, %v463
        %v466 = vsel %vm464, %v463, %v461
        %v467 = vadd.f32 %v452, %v466
        %v468 = vadd.f32 %v453, %v465
        %v469 = vrot.slane %v437, 2
        %v470 = vrot.slane %v438, 2
        %473 = vrot.lane.b32.xlu0 %v469, 15
        %v474 = vpop.permute.xlu0 %473
        %475 = vrot.lane.b32.xlu0 %v470, 15
        %v476 = vpop.permute.xlu0 %475
        %vm477 = vcmp.lt.s32.totalorder %v448, 15
        %v478 = vsel %vm477, %v474, %v476
        %v479 = vsel %vm477, %v476, %v474
        %v480 = vadd.f32 %v467, %v479
        %v481 = vadd.f32 %v468, %v478
        %v482 = vrot.slane %v437, 3
        %v483 = vrot.slane %v438, 3
        %486 = vrot.lane.b32.xlu0 %v482, 1
        %v487 = vpop.permute.xlu0 %486
        %488 = vrot.lane.b32.xlu0 %v483, 1
        %v489 = vpop.permute.xlu0 %488
        %vm490 = vcmp.lt.s32.totalorder %v448, 1
        %v491 = vsel %vm490, %v487, %v489
        %v492 = vsel %vm490, %v489, %v487
        %v493 = vadd.f32 %v480, %v492
        %v494 = vadd.f32 %v481, %v491
        %v495 = vrot.slane %v437, 4
        %v496 = vrot.slane %v438, 4
        %499 = vrot.lane.b32.xlu0 %v495, 127
        %v500 = vpop.permute.xlu0 %499
        %501 = vrot.lane.b32.xlu0 %v496, 127
        %v502 = vpop.permute.xlu0 %501
        %vm503 = vcmp.lt.s32.totalorder %v448, 127
        %v504 = vsel %vm503, %v500, %v502
        %v505 = vsel %vm503, %v502, %v500
        %v506 = vadd.f32 %v493, %v504
        %v507 = vadd.f32 %v494, %v505
        %v508 = vrot.slane %v437, 5
        %v509 = vrot.slane %v438, 5
        %512 = vrot.lane.b32.xlu0 %v508, 113
        %v513 = vpop.permute.xlu0 %512
        %514 = vrot.lane.b32.xlu0 %v509, 113
        %v515 = vpop.permute.xlu0 %514
        %vm516 = vcmp.lt.s32.totalorder %v448, 113
        %v517 = vsel %vm516, %v513, %v515
        %v518 = vsel %vm516, %v515, %v513
        %v519 = vadd.f32 %v506, %v517
        %v520 = vadd.f32 %v507, %v518
        %v521 = vrot.slane %v437, 6
        %v522 = vrot.slane %v438, 6
        %525 = vrot.lane.b32.xlu0 %v521, 112
        %v526 = vpop.permute.xlu0 %525
        %527 = vrot.lane.b32.xlu0 %v522, 112
        %v528 = vpop.permute.xlu0 %527
        %vm529 = vcmp.lt.s32.totalorder %v448, 112
        %v530 = vsel %vm529, %v526, %v528
        %v531 = vsel %vm529, %v528, %v526
        %v532 = vadd.f32 %v519, %v530
        %v533 = vadd.f32 %v520, %v531
        %v534 = vrot.slane %v437, 7
        %v535 = vrot.slane %v438, 7
        %538 = vrot.lane.b32.xlu0 %v534, 111
        %v539 = vpop.permute.xlu0 %538
        %540 = vrot.lane.b32.xlu0 %v535, 111
        %v541 = vpop.permute.xlu0 %540
        %vm542 = vcmp.lt.s32.totalorder %v448, 111
        %v543 = vsel %vm542, %v539, %v541
        %v544 = vsel %vm542, %v541, %v539
        %v545 = vadd.f32 %v532, %v543
        %v546 = vadd.f32 %v533, %v544
        %v547 = vmul.f32 %v545, 0.5
        %v548 = vmul.f32 %v546, 0.5
        %v549 = vtanh.pop %v547
        %v550 = vtanh.pop %v548
        %v551 = vadd.f32 %v549, 1.0
        %v552 = vadd.f32 %v550, 1.0
        %v553 = vmul.f32 %v551, 0.5
        %v554 = vmul.f32 %v552, 0.5
        %v555 = vld [vmem:[%s4] sm:$0x3]
        %557 = vset.pattern.permute.xlu0 0
        %558 = vperm.xlu0 %557, %v555
        %v559 = vpop.permute.xlu0 %558
        %v561 = vadd.f32 %v431, %v559
        %v562 = vadd.f32 %v433, %v559
        %v563 = vmax.f32 %v561, 0.0
        %v564 = vmax.f32 %v562, 0.0
        %v565 = vld [vmem:[%s5] sm:$0x1]
        %s566 = sld [smem:[#allocation2 + $0x3]]
        %v567 = vstv %s566
        %vm568 = vcmask 15360
        %v570 = vsel %vm568, %v565, 0
        %vm572 = vcmask 1041408
        %v574 = vsel %vm572, %v563, 0
        %v577 = vsel %vm572, %v564, 0
        %579 = vmatprep.subr.mxu0 0.0
        %580 = vmatpush1.msra.mxu0 0.0
        %581 = vmatprep.subr.mxu0 0.0
        %582 = vmatpush1.msra.mxu0 0.0
        %583 = vmatprep.subr.mxu0 0.0
        %584 = vmatpush1.msra.mxu0 0.0
        %585 = vmatprep.subr.mxu0 0.0
        %586 = vmatpush1.msra.mxu0 0.0
        %587 = vmatprep.subr.mxu0 0.0
        %588 = vmatpush1.msra.mxu0 0.0
        %589 = vmatprep.subr.mxu0 0.0
        %590 = vmatpush1.msra.mxu0 0.0
        %591 = vmatprep.subr.mxu0 0.0
        %592 = vmatpush1.msra.mxu0 0.0
        %593 = vmatprep.subr.mxu0 0.0
        %594 = vmatpush1.msra.mxu0 0.0
        %595 = vmatprep.subr.mxu0 0.0
        %596 = vmatpush1.msra.mxu0 0.0
        %597 = vmatprep.subr.mxu0 0.0
        %598 = vmatpush1.msra.mxu0 0.0
        %599 = vmatprep.subr.mxu0 0.0
        %600 = vmatpush1.msra.mxu0 0.0
        %601 = vmatprep.subr.mxu0 0.0
        %602 = vmatpush1.msra.mxu0 0.0
        %603 = vmatprep.subr.mxu0 0.0
        %604 = vmatpush1.msra.mxu0 0.0
        %605 = vmatprep.subr.mxu0 0.0
        %606 = vmatpush1.msra.mxu0 0.0
        %607 = vmatprep.subr.mxu0 0.0
        %608 = vmatpush1.msra.mxu0 0.0
        %609 = vmatprep.subr.mxu0 %v577
        %610 = vmatpush1.msra.mxu0 %v574
        %611 = vmatprep.subr.mxu0 0.0
        %612 = vmatpush2.msra.mxu0 0.0
        %613 = vmatprep.subr.mxu0 0.0
        %614 = vmatpush2.msra.mxu0 0.0
        %615 = vmatprep.subr.mxu0 0.0
        %616 = vmatpush2.msra.mxu0 0.0
        %617 = vmatprep.subr.mxu0 0.0
        %618 = vmatpush2.msra.mxu0 0.0
        %619 = vmatprep.subr.mxu0 0.0
        %620 = vmatpush2.msra.mxu0 0.0
        %621 = vmatprep.subr.mxu0 0.0
        %622 = vmatpush2.msra.mxu0 0.0
        %623 = vmatprep.subr.mxu0 0.0
        %624 = vmatpush2.msra.mxu0 0.0
        %625 = vmatprep.subr.mxu0 0.0
        %626 = vmatpush2.msra.mxu0 0.0
        %627 = vmatprep.subr.mxu0 0.0
        %628 = vmatpush2.msra.mxu0 0.0
        %629 = vmatprep.subr.mxu0 0.0
        %630 = vmatpush2.msra.mxu0 0.0
        %631 = vmatprep.subr.mxu0 0.0
        %632 = vmatpush2.msra.mxu0 0.0
        %633 = vmatprep.subr.mxu0 0.0
        %634 = vmatpush2.msra.mxu0 0.0
        %635 = vmatprep.subr.mxu0 0.0
        %636 = vmatpush2.msra.mxu0 0.0
        %637 = vmatprep.subr.mxu0 0.0
        %638 = vmatpush2.msra.mxu0 0.0
        %639 = vmatprep.subr.mxu0 0.0
        %640 = vmatpush2.msra.mxu0 0.0
        %641 = vmatprep.subr.mxu0 0.0
        %642 = vmatpush2.msra.mxu0 0.0
        %643 = vmatprep.mubr.f32.mxu0 0.0
        %644 = vmatmul.mubr.f32.gmra.mxu0 %v570
        %v645 = vpop.f32.mrf.mxu0
        %v646 = vadd.f32 %v567, %v645
        %v647 = vpop.f32.mrf.mxu0
        %v648 = vadd.f32 %v567, %v647
        %649 = vdwg.mxu0
        %v650 = vmul.f32 %v646, 0.5
        %v651 = vmul.f32 %v648, 0.5
        %v652 = vtanh.pop %v650
        %v653 = vtanh.pop %v651
        %v654 = vadd.f32 %v652, 1.0
        %v655 = vadd.f32 %v653, 1.0
        %v656 = vmul.f32 %v654, 0.5
        %v657 = vmul.f32 %v655, 0.5
        %v658 = vand.u32 2147483647, %v331
        %v659 = vand.u32 2147483647, %v332
        %v660 = vand.u32 2147483647, %v333
        %v661 = vand.u32 2147483647, %v334
        %v662 = vand.u32 2147483647, %v335
        %v663 = vand.u32 2147483647, %v336
        %v664 = vand.u32 2147483647, %v337
        %v665 = vand.u32 2147483647, %v338
        %s666 = sld [smem:[#allocation2 + %s25]]
        %v667 = vstv %s666
        %v668 = vmul.f32 %v667, %v656
        %v669 = vmul.f32 %v667, %v657
        %v670 = vlaneseq
        %v671 = vshrl.u32 %v670, 7
        %v672 = vsub.s32 0, %v671
        %v673 = vrot.slane %v668, %v672
        %v674 = vlaneseq
        %v675 = vshrl.u32 %v674, 7
        %v676 = vsub.s32 0, %v675
        %v677 = vrot.slane %v669, %v676
        %v678 = vsub.f32 %v658, %v673
        %v679 = vsub.f32 %v659, %v677
        %v680 = vsub.f32 %v660, %v673
        %v681 = vsub.f32 %v661, %v677
        %v682 = vsub.f32 %v662, %v673
        %v683 = vsub.f32 %v663, %v677
        %v684 = vsub.f32 %v664, %v673
        %v685 = vsub.f32 %v665, %v677
        %v686 = vmul.f32 %v678, 10.0
        %v687 = vmul.f32 %v679, 10.0
        %v688 = vmul.f32 %v680, 10.0
        %v689 = vmul.f32 %v681, 10.0
        %v690 = vmul.f32 %v682, 10.0
        %v691 = vmul.f32 %v683, 10.0
        %v692 = vmul.f32 %v684, 10.0
        %v693 = vmul.f32 %v685, 10.0
        %v694 = vmul.f32 %v686, 0.5
        %v695 = vmul.f32 %v687, 0.5
        %v696 = vmul.f32 %v688, 0.5
        %v697 = vmul.f32 %v689, 0.5
        %v698 = vmul.f32 %v690, 0.5
        %v699 = vmul.f32 %v691, 0.5
        %v700 = vmul.f32 %v692, 0.5
        %v701 = vmul.f32 %v693, 0.5
        %v702 = vtanh.pop %v694
        %v703 = vtanh.pop %v695
        %v704 = vtanh.pop %v696
        %v705 = vtanh.pop %v697
        %v706 = vtanh.pop %v698
        %v707 = vtanh.pop %v699
        %v708 = vtanh.pop %v700
        %v709 = vtanh.pop %v701
        %v710 = vadd.f32 %v702, 1.0
        %v711 = vadd.f32 %v703, 1.0
        %v712 = vadd.f32 %v704, 1.0
        %v713 = vadd.f32 %v705, 1.0
        %v714 = vadd.f32 %v706, 1.0
        %v715 = vadd.f32 %v707, 1.0
        %v716 = vadd.f32 %v708, 1.0
        %v717 = vadd.f32 %v709, 1.0
        %v718 = vmul.f32 %v710, 0.5
        %v719 = vmul.f32 %v711, 0.5
        %v720 = vmul.f32 %v712, 0.5
        %v721 = vmul.f32 %v713, 0.5
        %v722 = vmul.f32 %v714, 0.5
        %v723 = vmul.f32 %v715, 0.5
        %v724 = vmul.f32 %v716, 0.5
        %v725 = vmul.f32 %v717, 0.5
        %v726 = vmul.f32 %v331, %v718
        %v727 = vmul.f32 %v332, %v719
        %v728 = vmul.f32 %v333, %v720
        %v729 = vmul.f32 %v334, %v721
        %v730 = vmul.f32 %v335, %v722
        %v731 = vmul.f32 %v336, %v723
        %v732 = vmul.f32 %v337, %v724
        %v733 = vmul.f32 %v338, %v725
        %v734 = vld [vmem:[%s330] sm:$0xff]
        %v735 = vld [vmem:[%s330 + $0x8] sm:$0xff]
        %v736 = vld [vmem:[%s330 + $0x10] sm:$0xff]
        %v737 = vld [vmem:[%s330 + $0x18] sm:$0xff]
        %739 = vset.pattern.permute.xlu0 0
        %740 = vperm.xlu0 %739, %v734
        %v741 = vpop.permute.xlu0 %740
        %744 = vset.pattern.permute.xlu0 0
        %745 = vperm.xlu0 %744, %v735
        %v746 = vpop.permute.xlu0 %745
        %749 = vset.pattern.permute.xlu0 0
        %750 = vperm.xlu0 %749, %v736
        %v751 = vpop.permute.xlu0 %750
        %754 = vset.pattern.permute.xlu0 0
        %755 = vperm.xlu0 %754, %v737
        %v756 = vpop.permute.xlu0 %755
        %v758 = vmul.f32 %v726, %v741
        %v759 = vmul.f32 %v727, %v741
        %v760 = vmul.f32 %v728, %v746
        %v761 = vmul.f32 %v729, %v746
        %v762 = vmul.f32 %v730, %v751
        %v763 = vmul.f32 %v731, %v751
        %v764 = vmul.f32 %v732, %v756
        %v765 = vmul.f32 %v733, %v756
        %v766 = vlaneseq
        %v767 = vshrl.u32 %v766, 7
        %v768 = vsub.s32 0, %v767
        %v769 = vrot.slane %v553, %v768
        %v770 = vlaneseq
        %v771 = vshrl.u32 %v770, 7
        %v772 = vsub.s32 0, %v771
        %v773 = vrot.slane %v554, %v772
        %v774 = vmul.f32 %v758, %v769
        %v775 = vmul.f32 %v759, %v773
        %v776 = vmul.f32 %v760, %v769
        %v777 = vmul.f32 %v761, %v773
        %v778 = vmul.f32 %v762, %v769
        %v779 = vmul.f32 %v763, %v773
        %v780 = vmul.f32 %v764, %v769
        %v781 = vmul.f32 %v765, %v773
        %782 = vst [vmem:[%s325] sm:$0xff] %v774
        %783 = vst [vmem:[%s325 + $0x8] sm:$0xff] %v775
        %784 = vst [vmem:[%s325 + $0x10] sm:$0xff] %v776
        %785 = vst [vmem:[%s325 + $0x18] sm:$0xff] %v777
        %786 = vst [vmem:[%s325 + $0x20] sm:$0xff] %v778
        %787 = vst [vmem:[%s325 + $0x28] sm:$0xff] %v779
        %788 = vst [vmem:[%s325 + $0x30] sm:$0xff] %v780
        %789 = vst [vmem:[%s325 + $0x38] sm:$0xff] %v781
        %s790 = sand.u32 %s190, 1
        %s791 = scalar_lea.sflag [#allocation4], %s790
        %s792 = sand.u32 %s190, 1
        %s793 = smul.addr %s792, 64
        %s794 = scalar_lea.vmem [#allocation7], %s793
        // Predicated region
        $region57: #{tpu_custom_call.1} parent=47 // pred_check
          %p795 = pneg %p200
        $region58: #{tpu_custom_call.1} parent=47 // pred_check_branch
          %797 = sbr.rel (%p795) target = $region60
        $region59: #{tpu_custom_call.1} parent=47 // pred_region
          %s799 = ssub.s32 1024, 1024
          %800 = vsyncadd %s791, %s799
          %s801 = smul.addr %s25, 8
          %s802 = smul.addr %s801, 128
          %s803 = scalar_lea.hbm %s7, %s802
          %s804 = sshll.u32 %s794, 4
          %s805 = int_to_ptr.vmem [resolvable:$true] %s804
          %810 = dma.vmem_to_hbm [thread:$0]  %s805, 1024, %s803, %s791, 256, 256, 16
        $region60: #{tpu_custom_call.1} parent=47 // pred_fallthru
          _
      $region48: #{tpu_custom_call.1} parent=5 // pred_fallthru
        _
      %p811 = scmp.le.s32.totalorder 2, %s20
      // Predicated region
      $region61: #{tpu_custom_call.1} parent=5 // pred_check
        %p812 = pneg %p811
      $region62: #{tpu_custom_call.1} parent=5 // pred_check_branch
        %814 = sbr.rel (%p812) target = $region64
      $region63: #{tpu_custom_call.1} parent=5 // pred_region
        %s815 = ssub.s32 %s20, 2
        // Predicated region
        $region65: #{tpu_custom_call.1} parent=63 // pred_check
          %p816 = pneg %p206
        $region66: #{tpu_custom_call.1} parent=63 // pred_check_branch
          %818 = sbr.rel (%p816) target = $region68
        $region67: #{tpu_custom_call.1} parent=63 // pred_region
          %s819 = sand.u32 %s191, 1
          %s820 = scalar_lea.sflag [#allocation4], %s819
          %s821 = sand.u32 %s191, 1
          %s822 = smul.addr %s821, 64
          %s823 = scalar_lea.vmem [#allocation7], %s822
          %824 = dma.done %s820, 1024
        $region68: #{tpu_custom_call.1} parent=63 // pred_fallthru
          _
      $region64: #{tpu_custom_call.1} parent=5 // pred_fallthru
        _
    $region6: #{tpu_custom_call.1} parent=1 // loop_footer
      %s24 = sadd.s32 1, %s20
    $region7: #{tpu_custom_call.1} parent=1 // loop_footer_branch
      %19 = sbr.rel target = $region3
    $region8: #{tpu_custom_call.1} parent=1 // loop_exit
      _
    %825 = vsyncpa [#allocation3], 1
    %s826 = scalar_lea.sflag [#allocation3], 1
    %827 = vsyncpa %s826, 1
    %828 = vsyncpa [#allocation4], 1
    %s829 = scalar_lea.sflag [#allocation4], 1
    %830 = vsyncpa %s829, 1
    %831 = vsyncpa [#allocation5], 1
    %s832 = scalar_lea.sflag [#allocation5], 1
    %833 = vsyncpa %s832, 1

</llo_original>
